<compile_context>
chip_gen: v7x
topology: tpu7x:2x2x1
jax: 0.10.0
libtpu: 0.0.40
codegen_flags: <defaults>
</compile_context>

<pallas_src>
import jax
import jax.numpy as jnp
from jax.experimental import pallas as pl
from jax.experimental.pallas import tpu as pltpu


# ----------------------------- packed-parameter layout ----------------------
IN1, OUT1 = 8, 6
IN2, OUT2 = 6, 3
IN3, OUT3 = 3, 1

W1_OFF = 0
B1_OFF = W1_OFF + OUT1 * IN1          # 48
W2_OFF = B1_OFF + OUT1                # 54
B2_OFF = W2_OFF + OUT2 * IN2          # 72
W3_OFF = B2_OFF + OUT2                # 75
B3_OFF = W3_OFF + OUT3 * IN3          # 78
PACKED_LEN = B3_OFF + OUT3            # 79


def pack_params(params):
    """Pack (W1,b1,W2,b2,W3,b3) (W stored PyTorch-style (out,in)) into a flat
    f32 vector of length PACKED_LEN that lives in SMEM inside the kernel."""
    w1, b1, w2, b2, w3, b3 = params
    return jnp.concatenate(
        [w1.reshape(-1), b1.reshape(-1),
         w2.reshape(-1), b2.reshape(-1),
         w3.reshape(-1), b3.reshape(-1)]).astype(jnp.float32)


# ----------------------------------- kernel ---------------------------------
def mlp_kernel(p_ref, xT_ref, o_ref):
    # p_ref : SMEM (PACKED_LEN,) f32   -- all weights & biases
    # xT_ref: VMEM (8, TB)       f32   -- transposed activation tile
    # o_ref : VMEM (1, TB)             -- transposed output tile
    x = xT_ref[...].astype(jnp.float32)              # (8, TB)

    def dense_relu(h_rows, out_f, w_off, b_off):
        # h_rows: python list of (1, TB) rows.  Computes relu(W @ h + b)
        # as unrolled VPU FMAs with scalar weights broadcast from SMEM.
        in_f = len(h_rows)
        out_rows = []
        for j in range(out_f):
            acc = p_ref[w_off + j * in_f] * h_rows[0]
            for k in range(1, in_f):
                acc = acc + p_ref[w_off + j * in_f + k] * h_rows[k]
            acc = acc + p_ref[b_off + j]
            out_rows.append(jnp.maximum(acc, 0.0))
        return out_rows

    x_rows = [x[k:k + 1, :] for k in range(IN1)]     # 8 x (1, TB)
    h1 = dense_relu(x_rows, OUT1, W1_OFF, B1_OFF)    # 6 x (1, TB)
    h2 = dense_relu(h1, OUT2, W2_OFF, B2_OFF)        # 3 x (1, TB)
    h3 = dense_relu(h2, OUT3, W3_OFF, B3_OFF)        # 1 x (1, TB)

    o_ref[...] = h3[0].astype(o_ref.dtype)


# ---------------------------------- wrapper ---------------------------------
def _round_up(n, m):
    return ((n + m - 1) // m) * m


def mlp_forward(x, params, *, batch_tile=1024):
    """x: (B, 8) -> (B, 1), matching the PyTorch module."""
    B = x.shape[0]
    packed = pack_params(params)                     # (79,) f32

    # Lane-dense transposed layout: (features, batch), batch padded so the
    # lane (last) dimension of every block is a multiple of 128.
    tb = min(batch_tile, _round_up(B, 128))
    b_pad = _round_up(B, tb)
    n_tiles = b_pad // tb

    xT = jnp.transpose(x).astype(jnp.float32)        # (8, B)
    if b_pad != B:
        xT = jnp.pad(xT, ((0, 0), (0, b_pad - B)))

    out_t = pl.pallas_call(
        mlp_kernel,
        out_shape=jax.ShapeDtypeStruct((1, b_pad), x.dtype),
        grid_spec=pltpu.PrefetchScalarGridSpec(
            num_scalar_prefetch=0,
            grid=(n_tiles,),
            in_specs=[
                # Packed params: single tiny array resident in SMEM.
                pl.BlockSpec(memory_space=pltpu.MemorySpace.SMEM),
                # Activation stream: (8, TB) tiles marching over the batch.
                pl.BlockSpec((IN1, tb), lambda i: (0, i)),
            ],
            out_specs=pl.BlockSpec((1, tb), lambda i: (0, i)),
        ),
        compiler_params=pltpu.CompilerParams(
            dimension_semantics=("parallel",),       # shards over TCs on v7x
        ),
    )(packed, xT)

    # Back to the PyTorch layout (B, 1).
    return jnp.transpose(out_t[:, :B])


# ----------------------------- init & reference -----------------------------
def init_linear_params(key, in_features, out_features):
    # PyTorch-default-style uniform(+-1/sqrt(fan_in)); W stored as (out, in).
    kw, kb = jax.random.split(key)
    bound = 1.0 / jnp.sqrt(float(in_features))
    w = jax.random.uniform(kw, (out_features, in_features),
                           dtype=jnp.float32, minval=-bound, maxval=bound)
    b = jax.random.uniform(kb, (out_features,),
                           dtype=jnp.float32, minval=-bound, maxval=bound)
    return w, b


def reference_forward(x, params):
    w1, b1, w2, b2, w3, b3 = params
    h = jnp.maximum(x @ w1.T + b1, 0.0)
    h = jnp.maximum(h @ w2.T + b2, 0.0)
    h = jnp.maximum(h @ w3.T + b3, 0.0)
    return h


if __name__ == "__main__":
    key = jax.random.PRNGKey(0)
    k_x, k1, k2, k3 = jax.random.split(key, 4)

    batch = 8
    x = jax.random.normal(k_x, (batch, 8), dtype=jnp.float32)

    w1, b1 = init_linear_params(k1, 8, 6)
    w2, b2 = init_linear_params(k2, 6, 3)
    w3, b3 = init_linear_params(k3, 3, 1)
    params = (w1, b1, w2, b2, w3, b3)

    out = mlp_forward(x, params)
    out = jax.block_until_ready(out)

    ref = reference_forward(x, params)
    assert out.shape == (batch, 1), out.shape
    assert jnp.allclose(out, ref, atol=1e-5, rtol=1e-5), "mismatch vs reference"

    print("KERNEL_OK")
</pallas_src>

<mosaic_0001>
module attributes {stable_mosaic.version = 11 : i64} {
  func.func @mlp_kernel(%arg0: i32, %arg1: memref<79xf32, #tpu.memory_space<smem>>, %arg2: memref<8x128xf32, #tpu.memory_space<vmem>>, %arg3: memref<1x128xf32, #tpu.memory_space<vmem>>) attributes {dimension_semantics = [#tpu.dimension_semantics<parallel>], iteration_bounds = array<i64: 1>, scalar_prefetch = 0 : i64, scratch_operands = 0 : i64, tpu.core_type = #tpu.core_type<tc>, window_params = [{transform_indices = @transform_0, window_bounds = array<i64: 79>}, {transform_indices = @transform_1, window_bounds = array<i64: 8, 128>}, {transform_indices = @transform_2, window_bounds = array<i64: 1, 128>}]} {
    %c0 = arith.constant 0 : index
    %c0_0 = arith.constant 0 : index
    %0 = vector.load %arg2[%c0, %c0_0] : memref<8x128xf32, #tpu.memory_space<vmem>>, vector<8x128xf32>
    %1 = vector.extract_strided_slice %0 {offsets = [0, 0], sizes = [1, 128], strides = [1, 1]} : vector<8x128xf32> to vector<1x128xf32>
    %2 = vector.extract_strided_slice %0 {offsets = [1, 0], sizes = [1, 128], strides = [1, 1]} : vector<8x128xf32> to vector<1x128xf32>
    %3 = vector.extract_strided_slice %0 {offsets = [2, 0], sizes = [1, 128], strides = [1, 1]} : vector<8x128xf32> to vector<1x128xf32>
    %4 = vector.extract_strided_slice %0 {offsets = [3, 0], sizes = [1, 128], strides = [1, 1]} : vector<8x128xf32> to vector<1x128xf32>
    %5 = vector.extract_strided_slice %0 {offsets = [4, 0], sizes = [1, 128], strides = [1, 1]} : vector<8x128xf32> to vector<1x128xf32>
    %6 = vector.extract_strided_slice %0 {offsets = [5, 0], sizes = [1, 128], strides = [1, 1]} : vector<8x128xf32> to vector<1x128xf32>
    %7 = vector.extract_strided_slice %0 {offsets = [6, 0], sizes = [1, 128], strides = [1, 1]} : vector<8x128xf32> to vector<1x128xf32>
    %8 = vector.extract_strided_slice %0 {offsets = [7, 0], sizes = [1, 128], strides = [1, 1]} : vector<8x128xf32> to vector<1x128xf32>
    %c0_1 = arith.constant 0 : index
    %9 = memref.load %arg1[%c0_1] : memref<79xf32, #tpu.memory_space<smem>>
    %10 = vector.broadcast %9 : f32 to vector<1x128xf32>
    %11 = arith.mulf %10, %1 : vector<1x128xf32>
    %c1 = arith.constant 1 : index
    %12 = memref.load %arg1[%c1] : memref<79xf32, #tpu.memory_space<smem>>
    %13 = vector.broadcast %12 : f32 to vector<1x128xf32>
    %14 = arith.mulf %13, %2 : vector<1x128xf32>
    %15 = arith.addf %11, %14 : vector<1x128xf32>
    %c2 = arith.constant 2 : index
    %16 = memref.load %arg1[%c2] : memref<79xf32, #tpu.memory_space<smem>>
    %17 = vector.broadcast %16 : f32 to vector<1x128xf32>
    %18 = arith.mulf %17, %3 : vector<1x128xf32>
    %19 = arith.addf %15, %18 : vector<1x128xf32>
    %c3 = arith.constant 3 : index
    %20 = memref.load %arg1[%c3] : memref<79xf32, #tpu.memory_space<smem>>
    %21 = vector.broadcast %20 : f32 to vector<1x128xf32>
    %22 = arith.mulf %21, %4 : vector<1x128xf32>
    %23 = arith.addf %19, %22 : vector<1x128xf32>
    %c4 = arith.constant 4 : index
    %24 = memref.load %arg1[%c4] : memref<79xf32, #tpu.memory_space<smem>>
    %25 = vector.broadcast %24 : f32 to vector<1x128xf32>
    %26 = arith.mulf %25, %5 : vector<1x128xf32>
    %27 = arith.addf %23, %26 : vector<1x128xf32>
    %c5 = arith.constant 5 : index
    %28 = memref.load %arg1[%c5] : memref<79xf32, #tpu.memory_space<smem>>
    %29 = vector.broadcast %28 : f32 to vector<1x128xf32>
    %30 = arith.mulf %29, %6 : vector<1x128xf32>
    %31 = arith.addf %27, %30 : vector<1x128xf32>
    %c6 = arith.constant 6 : index
    %32 = memref.load %arg1[%c6] : memref<79xf32, #tpu.memory_space<smem>>
    %33 = vector.broadcast %32 : f32 to vector<1x128xf32>
    %34 = arith.mulf %33, %7 : vector<1x128xf32>
    %35 = arith.addf %31, %34 : vector<1x128xf32>
    %c7 = arith.constant 7 : index
    %36 = memref.load %arg1[%c7] : memref<79xf32, #tpu.memory_space<smem>>
    %37 = vector.broadcast %36 : f32 to vector<1x128xf32>
    %38 = arith.mulf %37, %8 : vector<1x128xf32>
    %39 = arith.addf %35, %38 : vector<1x128xf32>
    %c48 = arith.constant 48 : index
    %40 = memref.load %arg1[%c48] : memref<79xf32, #tpu.memory_space<smem>>
    %41 = vector.broadcast %40 : f32 to vector<1x128xf32>
    %42 = arith.addf %39, %41 : vector<1x128xf32>
    %cst = arith.constant 0.000000e+00 : f32
    %43 = vector.broadcast %cst : f32 to vector<1x128xf32>
    %44 = arith.maximumf %42, %43 : vector<1x128xf32>
    %c8 = arith.constant 8 : index
    %45 = memref.load %arg1[%c8] : memref<79xf32, #tpu.memory_space<smem>>
    %46 = vector.broadcast %45 : f32 to vector<1x128xf32>
    %47 = arith.mulf %46, %1 : vector<1x128xf32>
    %c9 = arith.constant 9 : index
    %48 = memref.load %arg1[%c9] : memref<79xf32, #tpu.memory_space<smem>>
    %49 = vector.broadcast %48 : f32 to vector<1x128xf32>
    %50 = arith.mulf %49, %2 : vector<1x128xf32>
    %51 = arith.addf %47, %50 : vector<1x128xf32>
    %c10 = arith.constant 10 : index
    %52 = memref.load %arg1[%c10] : memref<79xf32, #tpu.memory_space<smem>>
    %53 = vector.broadcast %52 : f32 to vector<1x128xf32>
    %54 = arith.mulf %53, %3 : vector<1x128xf32>
    %55 = arith.addf %51, %54 : vector<1x128xf32>
    %c11 = arith.constant 11 : index
    %56 = memref.load %arg1[%c11] : memref<79xf32, #tpu.memory_space<smem>>
    %57 = vector.broadcast %56 : f32 to vector<1x128xf32>
    %58 = arith.mulf %57, %4 : vector<1x128xf32>
    %59 = arith.addf %55, %58 : vector<1x128xf32>
    %c12 = arith.constant 12 : index
    %60 = memref.load %arg1[%c12] : memref<79xf32, #tpu.memory_space<smem>>
    %61 = vector.broadcast %60 : f32 to vector<1x128xf32>
    %62 = arith.mulf %61, %5 : vector<1x128xf32>
    %63 = arith.addf %59, %62 : vector<1x128xf32>
    %c13 = arith.constant 13 : index
    %64 = memref.load %arg1[%c13] : memref<79xf32, #tpu.memory_space<smem>>
    %65 = vector.broadcast %64 : f32 to vector<1x128xf32>
    %66 = arith.mulf %65, %6 : vector<1x128xf32>
    %67 = arith.addf %63, %66 : vector<1x128xf32>
    %c14 = arith.constant 14 : index
    %68 = memref.load %arg1[%c14] : memref<79xf32, #tpu.memory_space<smem>>
    %69 = vector.broadcast %68 : f32 to vector<1x128xf32>
    %70 = arith.mulf %69, %7 : vector<1x128xf32>
    %71 = arith.addf %67, %70 : vector<1x128xf32>
    %c15 = arith.constant 15 : index
    %72 = memref.load %arg1[%c15] : memref<79xf32, #tpu.memory_space<smem>>
    %73 = vector.broadcast %72 : f32 to vector<1x128xf32>
    %74 = arith.mulf %73, %8 : vector<1x128xf32>
    %75 = arith.addf %71, %74 : vector<1x128xf32>
    %c49 = arith.constant 49 : index
    %76 = memref.load %arg1[%c49] : memref<79xf32, #tpu.memory_space<smem>>
    %77 = vector.broadcast %76 : f32 to vector<1x128xf32>
    %78 = arith.addf %75, %77 : vector<1x128xf32>
    %cst_2 = arith.constant 0.000000e+00 : f32
    %79 = vector.broadcast %cst_2 : f32 to vector<1x128xf32>
    %80 = arith.maximumf %78, %79 : vector<1x128xf32>
    %c16 = arith.constant 16 : index
    %81 = memref.load %arg1[%c16] : memref<79xf32, #tpu.memory_space<smem>>
    %82 = vector.broadcast %81 : f32 to vector<1x128xf32>
    %83 = arith.mulf %82, %1 : vector<1x128xf32>
    %c17 = arith.constant 17 : index
    %84 = memref.load %arg1[%c17] : memref<79xf32, #tpu.memory_space<smem>>
    %85 = vector.broadcast %84 : f32 to vector<1x128xf32>
    %86 = arith.mulf %85, %2 : vector<1x128xf32>
    %87 = arith.addf %83, %86 : vector<1x128xf32>
    %c18 = arith.constant 18 : index
    %88 = memref.load %arg1[%c18] : memref<79xf32, #tpu.memory_space<smem>>
    %89 = vector.broadcast %88 : f32 to vector<1x128xf32>
    %90 = arith.mulf %89, %3 : vector<1x128xf32>
    %91 = arith.addf %87, %90 : vector<1x128xf32>
    %c19 = arith.constant 19 : index
    %92 = memref.load %arg1[%c19] : memref<79xf32, #tpu.memory_space<smem>>
    %93 = vector.broadcast %92 : f32 to vector<1x128xf32>
    %94 = arith.mulf %93, %4 : vector<1x128xf32>
    %95 = arith.addf %91, %94 : vector<1x128xf32>
    %c20 = arith.constant 20 : index
    %96 = memref.load %arg1[%c20] : memref<79xf32, #tpu.memory_space<smem>>
    %97 = vector.broadcast %96 : f32 to vector<1x128xf32>
    %98 = arith.mulf %97, %5 : vector<1x128xf32>
    %99 = arith.addf %95, %98 : vector<1x128xf32>
    %c21 = arith.constant 21 : index
    %100 = memref.load %arg1[%c21] : memref<79xf32, #tpu.memory_space<smem>>
    %101 = vector.broadcast %100 : f32 to vector<1x128xf32>
    %102 = arith.mulf %101, %6 : vector<1x128xf32>
    %103 = arith.addf %99, %102 : vector<1x128xf32>
    %c22 = arith.constant 22 : index
    %104 = memref.load %arg1[%c22] : memref<79xf32, #tpu.memory_space<smem>>
    %105 = vector.broadcast %104 : f32 to vector<1x128xf32>
    %106 = arith.mulf %105, %7 : vector<1x128xf32>
    %107 = arith.addf %103, %106 : vector<1x128xf32>
    %c23 = arith.constant 23 : index
    %108 = memref.load %arg1[%c23] : memref<79xf32, #tpu.memory_space<smem>>
    %109 = vector.broadcast %108 : f32 to vector<1x128xf32>
    %110 = arith.mulf %109, %8 : vector<1x128xf32>
    %111 = arith.addf %107, %110 : vector<1x128xf32>
    %c50 = arith.constant 50 : index
    %112 = memref.load %arg1[%c50] : memref<79xf32, #tpu.memory_space<smem>>
    %113 = vector.broadcast %112 : f32 to vector<1x128xf32>
    %114 = arith.addf %111, %113 : vector<1x128xf32>
    %cst_3 = arith.constant 0.000000e+00 : f32
    %115 = vector.broadcast %cst_3 : f32 to vector<1x128xf32>
    %116 = arith.maximumf %114, %115 : vector<1x128xf32>
    %c24 = arith.constant 24 : index
    %117 = memref.load %arg1[%c24] : memref<79xf32, #tpu.memory_space<smem>>
    %118 = vector.broadcast %117 : f32 to vector<1x128xf32>
    %119 = arith.mulf %118, %1 : vector<1x128xf32>
    %c25 = arith.constant 25 : index
    %120 = memref.load %arg1[%c25] : memref<79xf32, #tpu.memory_space<smem>>
    %121 = vector.broadcast %120 : f32 to vector<1x128xf32>
    %122 = arith.mulf %121, %2 : vector<1x128xf32>
    %123 = arith.addf %119, %122 : vector<1x128xf32>
    %c26 = arith.constant 26 : index
    %124 = memref.load %arg1[%c26] : memref<79xf32, #tpu.memory_space<smem>>
    %125 = vector.broadcast %124 : f32 to vector<1x128xf32>
    %126 = arith.mulf %125, %3 : vector<1x128xf32>
    %127 = arith.addf %123, %126 : vector<1x128xf32>
    %c27 = arith.constant 27 : index
    %128 = memref.load %arg1[%c27] : memref<79xf32, #tpu.memory_space<smem>>
    %129 = vector.broadcast %128 : f32 to vector<1x128xf32>
    %130 = arith.mulf %129, %4 : vector<1x128xf32>
    %131 = arith.addf %127, %130 : vector<1x128xf32>
    %c28 = arith.constant 28 : index
    %132 = memref.load %arg1[%c28] : memref<79xf32, #tpu.memory_space<smem>>
    %133 = vector.broadcast %132 : f32 to vector<1x128xf32>
    %134 = arith.mulf %133, %5 : vector<1x128xf32>
    %135 = arith.addf %131, %134 : vector<1x128xf32>
    %c29 = arith.constant 29 : index
    %136 = memref.load %arg1[%c29] : memref<79xf32, #tpu.memory_space<smem>>
    %137 = vector.broadcast %136 : f32 to vector<1x128xf32>
    %138 = arith.mulf %137, %6 : vector<1x128xf32>
    %139 = arith.addf %135, %138 : vector<1x128xf32>
    %c30 = arith.constant 30 : index
    %140 = memref.load %arg1[%c30] : memref<79xf32, #tpu.memory_space<smem>>
    %141 = vector.broadcast %140 : f32 to vector<1x128xf32>
    %142 = arith.mulf %141, %7 : vector<1x128xf32>
    %143 = arith.addf %139, %142 : vector<1x128xf32>
    %c31 = arith.constant 31 : index
    %144 = memref.load %arg1[%c31] : memref<79xf32, #tpu.memory_space<smem>>
    %145 = vector.broadcast %144 : f32 to vector<1x128xf32>
    %146 = arith.mulf %145, %8 : vector<1x128xf32>
    %147 = arith.addf %143, %146 : vector<1x128xf32>
    %c51 = arith.constant 51 : index
    %148 = memref.load %arg1[%c51] : memref<79xf32, #tpu.memory_space<smem>>
    %149 = vector.broadcast %148 : f32 to vector<1x128xf32>
    %150 = arith.addf %147, %149 : vector<1x128xf32>
    %cst_4 = arith.constant 0.000000e+00 : f32
    %151 = vector.broadcast %cst_4 : f32 to vector<1x128xf32>
    %152 = arith.maximumf %150, %151 : vector<1x128xf32>
    %c32 = arith.constant 32 : index
    %153 = memref.load %arg1[%c32] : memref<79xf32, #tpu.memory_space<smem>>
    %154 = vector.broadcast %153 : f32 to vector<1x128xf32>
    %155 = arith.mulf %154, %1 : vector<1x128xf32>
    %c33 = arith.constant 33 : index
    %156 = memref.load %arg1[%c33] : memref<79xf32, #tpu.memory_space<smem>>
    %157 = vector.broadcast %156 : f32 to vector<1x128xf32>
    %158 = arith.mulf %157, %2 : vector<1x128xf32>
    %159 = arith.addf %155, %158 : vector<1x128xf32>
    %c34 = arith.constant 34 : index
    %160 = memref.load %arg1[%c34] : memref<79xf32, #tpu.memory_space<smem>>
    %161 = vector.broadcast %160 : f32 to vector<1x128xf32>
    %162 = arith.mulf %161, %3 : vector<1x128xf32>
    %163 = arith.addf %159, %162 : vector<1x128xf32>
    %c35 = arith.constant 35 : index
    %164 = memref.load %arg1[%c35] : memref<79xf32, #tpu.memory_space<smem>>
    %165 = vector.broadcast %164 : f32 to vector<1x128xf32>
    %166 = arith.mulf %165, %4 : vector<1x128xf32>
    %167 = arith.addf %163, %166 : vector<1x128xf32>
    %c36 = arith.constant 36 : index
    %168 = memref.load %arg1[%c36] : memref<79xf32, #tpu.memory_space<smem>>
    %169 = vector.broadcast %168 : f32 to vector<1x128xf32>
    %170 = arith.mulf %169, %5 : vector<1x128xf32>
    %171 = arith.addf %167, %170 : vector<1x128xf32>
    %c37 = arith.constant 37 : index
    %172 = memref.load %arg1[%c37] : memref<79xf32, #tpu.memory_space<smem>>
    %173 = vector.broadcast %172 : f32 to vector<1x128xf32>
    %174 = arith.mulf %173, %6 : vector<1x128xf32>
    %175 = arith.addf %171, %174 : vector<1x128xf32>
    %c38 = arith.constant 38 : index
    %176 = memref.load %arg1[%c38] : memref<79xf32, #tpu.memory_space<smem>>
    %177 = vector.broadcast %176 : f32 to vector<1x128xf32>
    %178 = arith.mulf %177, %7 : vector<1x128xf32>
    %179 = arith.addf %175, %178 : vector<1x128xf32>
    %c39 = arith.constant 39 : index
    %180 = memref.load %arg1[%c39] : memref<79xf32, #tpu.memory_space<smem>>
    %181 = vector.broadcast %180 : f32 to vector<1x128xf32>
    %182 = arith.mulf %181, %8 : vector<1x128xf32>
    %183 = arith.addf %179, %182 : vector<1x128xf32>
    %c52 = arith.constant 52 : index
    %184 = memref.load %arg1[%c52] : memref<79xf32, #tpu.memory_space<smem>>
    %185 = vector.broadcast %184 : f32 to vector<1x128xf32>
    %186 = arith.addf %183, %185 : vector<1x128xf32>
    %cst_5 = arith.constant 0.000000e+00 : f32
    %187 = vector.broadcast %cst_5 : f32 to vector<1x128xf32>
    %188 = arith.maximumf %186, %187 : vector<1x128xf32>
    %c40 = arith.constant 40 : index
    %189 = memref.load %arg1[%c40] : memref<79xf32, #tpu.memory_space<smem>>
    %190 = vector.broadcast %189 : f32 to vector<1x128xf32>
    %191 = arith.mulf %190, %1 : vector<1x128xf32>
    %c41 = arith.constant 41 : index
    %192 = memref.load %arg1[%c41] : memref<79xf32, #tpu.memory_space<smem>>
    %193 = vector.broadcast %192 : f32 to vector<1x128xf32>
    %194 = arith.mulf %193, %2 : vector<1x128xf32>
    %195 = arith.addf %191, %194 : vector<1x128xf32>
    %c42 = arith.constant 42 : index
    %196 = memref.load %arg1[%c42] : memref<79xf32, #tpu.memory_space<smem>>
    %197 = vector.broadcast %196 : f32 to vector<1x128xf32>
    %198 = arith.mulf %197, %3 : vector<1x128xf32>
    %199 = arith.addf %195, %198 : vector<1x128xf32>
    %c43 = arith.constant 43 : index
    %200 = memref.load %arg1[%c43] : memref<79xf32, #tpu.memory_space<smem>>
    %201 = vector.broadcast %200 : f32 to vector<1x128xf32>
    %202 = arith.mulf %201, %4 : vector<1x128xf32>
    %203 = arith.addf %199, %202 : vector<1x128xf32>
    %c44 = arith.constant 44 : index
    %204 = memref.load %arg1[%c44] : memref<79xf32, #tpu.memory_space<smem>>
    %205 = vector.broadcast %204 : f32 to vector<1x128xf32>
    %206 = arith.mulf %205, %5 : vector<1x128xf32>
    %207 = arith.addf %203, %206 : vector<1x128xf32>
    %c45 = arith.constant 45 : index
    %208 = memref.load %arg1[%c45] : memref<79xf32, #tpu.memory_space<smem>>
    %209 = vector.broadcast %208 : f32 to vector<1x128xf32>
    %210 = arith.mulf %209, %6 : vector<1x128xf32>
    %211 = arith.addf %207, %210 : vector<1x128xf32>
    %c46 = arith.constant 46 : index
    %212 = memref.load %arg1[%c46] : memref<79xf32, #tpu.memory_space<smem>>
    %213 = vector.broadcast %212 : f32 to vector<1x128xf32>
    %214 = arith.mulf %213, %7 : vector<1x128xf32>
    %215 = arith.addf %211, %214 : vector<1x128xf32>
    %c47 = arith.constant 47 : index
    %216 = memref.load %arg1[%c47] : memref<79xf32, #tpu.memory_space<smem>>
    %217 = vector.broadcast %216 : f32 to vector<1x128xf32>
    %218 = arith.mulf %217, %8 : vector<1x128xf32>
    %219 = arith.addf %215, %218 : vector<1x128xf32>
    %c53 = arith.constant 53 : index
    %220 = memref.load %arg1[%c53] : memref<79xf32, #tpu.memory_space<smem>>
    %221 = vector.broadcast %220 : f32 to vector<1x128xf32>
    %222 = arith.addf %219, %221 : vector<1x128xf32>
    %cst_6 = arith.constant 0.000000e+00 : f32
    %223 = vector.broadcast %cst_6 : f32 to vector<1x128xf32>
    %224 = arith.maximumf %222, %223 : vector<1x128xf32>
    %c54 = arith.constant 54 : index
    %225 = memref.load %arg1[%c54] : memref<79xf32, #tpu.memory_space<smem>>
    %226 = vector.broadcast %225 : f32 to vector<1x128xf32>
    %227 = arith.mulf %226, %44 : vector<1x128xf32>
    %c55 = arith.constant 55 : index
    %228 = memref.load %arg1[%c55] : memref<79xf32, #tpu.memory_space<smem>>
    %229 = vector.broadcast %228 : f32 to vector<1x128xf32>
    %230 = arith.mulf %229, %80 : vector<1x128xf32>
    %231 = arith.addf %227, %230 : vector<1x128xf32>
    %c56 = arith.constant 56 : index
    %232 = memref.load %arg1[%c56] : memref<79xf32, #tpu.memory_space<smem>>
    %233 = vector.broadcast %232 : f32 to vector<1x128xf32>
    %234 = arith.mulf %233, %116 : vector<1x128xf32>
    %235 = arith.addf %231, %234 : vector<1x128xf32>
    %c57 = arith.constant 57 : index
    %236 = memref.load %arg1[%c57] : memref<79xf32, #tpu.memory_space<smem>>
    %237 = vector.broadcast %236 : f32 to vector<1x128xf32>
    %238 = arith.mulf %237, %152 : vector<1x128xf32>
    %239 = arith.addf %235, %238 : vector<1x128xf32>
    %c58 = arith.constant 58 : index
    %240 = memref.load %arg1[%c58] : memref<79xf32, #tpu.memory_space<smem>>
    %241 = vector.broadcast %240 : f32 to vector<1x128xf32>
    %242 = arith.mulf %241, %188 : vector<1x128xf32>
    %243 = arith.addf %239, %242 : vector<1x128xf32>
    %c59 = arith.constant 59 : index
    %244 = memref.load %arg1[%c59] : memref<79xf32, #tpu.memory_space<smem>>
    %245 = vector.broadcast %244 : f32 to vector<1x128xf32>
    %246 = arith.mulf %245, %224 : vector<1x128xf32>
    %247 = arith.addf %243, %246 : vector<1x128xf32>
    %c72 = arith.constant 72 : index
    %248 = memref.load %arg1[%c72] : memref<79xf32, #tpu.memory_space<smem>>
    %249 = vector.broadcast %248 : f32 to vector<1x128xf32>
    %250 = arith.addf %247, %249 : vector<1x128xf32>
    %cst_7 = arith.constant 0.000000e+00 : f32
    %251 = vector.broadcast %cst_7 : f32 to vector<1x128xf32>
    %252 = arith.maximumf %250, %251 : vector<1x128xf32>
    %c60 = arith.constant 60 : index
    %253 = memref.load %arg1[%c60] : memref<79xf32, #tpu.memory_space<smem>>
    %254 = vector.broadcast %253 : f32 to vector<1x128xf32>
    %255 = arith.mulf %254, %44 : vector<1x128xf32>
    %c61 = arith.constant 61 : index
    %256 = memref.load %arg1[%c61] : memref<79xf32, #tpu.memory_space<smem>>
    %257 = vector.broadcast %256 : f32 to vector<1x128xf32>
    %258 = arith.mulf %257, %80 : vector<1x128xf32>
    %259 = arith.addf %255, %258 : vector<1x128xf32>
    %c62 = arith.constant 62 : index
    %260 = memref.load %arg1[%c62] : memref<79xf32, #tpu.memory_space<smem>>
    %261 = vector.broadcast %260 : f32 to vector<1x128xf32>
    %262 = arith.mulf %261, %116 : vector<1x128xf32>
    %263 = arith.addf %259, %262 : vector<1x128xf32>
    %c63 = arith.constant 63 : index
    %264 = memref.load %arg1[%c63] : memref<79xf32, #tpu.memory_space<smem>>
    %265 = vector.broadcast %264 : f32 to vector<1x128xf32>
    %266 = arith.mulf %265, %152 : vector<1x128xf32>
    %267 = arith.addf %263, %266 : vector<1x128xf32>
    %c64 = arith.constant 64 : index
    %268 = memref.load %arg1[%c64] : memref<79xf32, #tpu.memory_space<smem>>
    %269 = vector.broadcast %268 : f32 to vector<1x128xf32>
    %270 = arith.mulf %269, %188 : vector<1x128xf32>
    %271 = arith.addf %267, %270 : vector<1x128xf32>
    %c65 = arith.constant 65 : index
    %272 = memref.load %arg1[%c65] : memref<79xf32, #tpu.memory_space<smem>>
    %273 = vector.broadcast %272 : f32 to vector<1x128xf32>
    %274 = arith.mulf %273, %224 : vector<1x128xf32>
    %275 = arith.addf %271, %274 : vector<1x128xf32>
    %c73 = arith.constant 73 : index
    %276 = memref.load %arg1[%c73] : memref<79xf32, #tpu.memory_space<smem>>
    %277 = vector.broadcast %276 : f32 to vector<1x128xf32>
    %278 = arith.addf %275, %277 : vector<1x128xf32>
    %cst_8 = arith.constant 0.000000e+00 : f32
    %279 = vector.broadcast %cst_8 : f32 to vector<1x128xf32>
    %280 = arith.maximumf %278, %279 : vector<1x128xf32>
    %c66 = arith.constant 66 : index
    %281 = memref.load %arg1[%c66] : memref<79xf32, #tpu.memory_space<smem>>
    %282 = vector.broadcast %281 : f32 to vector<1x128xf32>
    %283 = arith.mulf %282, %44 : vector<1x128xf32>
    %c67 = arith.constant 67 : index
    %284 = memref.load %arg1[%c67] : memref<79xf32, #tpu.memory_space<smem>>
    %285 = vector.broadcast %284 : f32 to vector<1x128xf32>
    %286 = arith.mulf %285, %80 : vector<1x128xf32>
    %287 = arith.addf %283, %286 : vector<1x128xf32>
    %c68 = arith.constant 68 : index
    %288 = memref.load %arg1[%c68] : memref<79xf32, #tpu.memory_space<smem>>
    %289 = vector.broadcast %288 : f32 to vector<1x128xf32>
    %290 = arith.mulf %289, %116 : vector<1x128xf32>
    %291 = arith.addf %287, %290 : vector<1x128xf32>
    %c69 = arith.constant 69 : index
    %292 = memref.load %arg1[%c69] : memref<79xf32, #tpu.memory_space<smem>>
    %293 = vector.broadcast %292 : f32 to vector<1x128xf32>
    %294 = arith.mulf %293, %152 : vector<1x128xf32>
    %295 = arith.addf %291, %294 : vector<1x128xf32>
    %c70 = arith.constant 70 : index
    %296 = memref.load %arg1[%c70] : memref<79xf32, #tpu.memory_space<smem>>
    %297 = vector.broadcast %296 : f32 to vector<1x128xf32>
    %298 = arith.mulf %297, %188 : vector<1x128xf32>
    %299 = arith.addf %295, %298 : vector<1x128xf32>
    %c71 = arith.constant 71 : index
    %300 = memref.load %arg1[%c71] : memref<79xf32, #tpu.memory_space<smem>>
    %301 = vector.broadcast %300 : f32 to vector<1x128xf32>
    %302 = arith.mulf %301, %224 : vector<1x128xf32>
    %303 = arith.addf %299, %302 : vector<1x128xf32>
    %c74 = arith.constant 74 : index
    %304 = memref.load %arg1[%c74] : memref<79xf32, #tpu.memory_space<smem>>
    %305 = vector.broadcast %304 : f32 to vector<1x128xf32>
    %306 = arith.addf %303, %305 : vector<1x128xf32>
    %cst_9 = arith.constant 0.000000e+00 : f32
    %307 = vector.broadcast %cst_9 : f32 to vector<1x128xf32>
    %308 = arith.maximumf %306, %307 : vector<1x128xf32>
    %c75 = arith.constant 75 : index
    %309 = memref.load %arg1[%c75] : memref<79xf32, #tpu.memory_space<smem>>
    %310 = vector.broadcast %309 : f32 to vector<1x128xf32>
    %311 = arith.mulf %310, %252 : vector<1x128xf32>
    %c76 = arith.constant 76 : index
    %312 = memref.load %arg1[%c76] : memref<79xf32, #tpu.memory_space<smem>>
    %313 = vector.broadcast %312 : f32 to vector<1x128xf32>
    %314 = arith.mulf %313, %280 : vector<1x128xf32>
    %315 = arith.addf %311, %314 : vector<1x128xf32>
    %c77 = arith.constant 77 : index
    %316 = memref.load %arg1[%c77] : memref<79xf32, #tpu.memory_space<smem>>
    %317 = vector.broadcast %316 : f32 to vector<1x128xf32>
    %318 = arith.mulf %317, %308 : vector<1x128xf32>
    %319 = arith.addf %315, %318 : vector<1x128xf32>
    %c78 = arith.constant 78 : index
    %320 = memref.load %arg1[%c78] : memref<79xf32, #tpu.memory_space<smem>>
    %321 = vector.broadcast %320 : f32 to vector<1x128xf32>
    %322 = arith.addf %319, %321 : vector<1x128xf32>
    %cst_10 = arith.constant 0.000000e+00 : f32
    %323 = vector.broadcast %cst_10 : f32 to vector<1x128xf32>
    %324 = arith.maximumf %322, %323 : vector<1x128xf32>
    %c0_11 = arith.constant 0 : index
    %c0_12 = arith.constant 0 : index
    %325 = vector.load %arg3[%c0_11, %c0_12] : memref<1x128xf32, #tpu.memory_space<vmem>>, vector<1x128xf32>
    tpu.vector_store %arg3[%c0_11, %c0_12], %324 {strides = array<i32>} : memref<1x128xf32, #tpu.memory_space<vmem>>, vector<1x128xf32>,
    return
  }
  func.func @transform_0(%arg0: i32) -> i32 {
    %c0_i32 = arith.constant 0 : i32
    %c0_i32_0 = arith.constant 0 : i32
    return %c0_i32 : i32
  }
  func.func @transform_1(%arg0: i32) -> (i32, i32) {
    %c0_i32 = arith.constant 0 : i32
    %c0_i32_0 = arith.constant 0 : i32
    return %c0_i32, %arg0 : i32, i32
  }
  func.func @transform_2(%arg0: i32) -> (i32, i32) {
    %c0_i32 = arith.constant 0 : i32
    %c0_i32_0 = arith.constant 0 : i32
    return %c0_i32, %arg0 : i32, i32
  }
}

</mosaic_0001>

<llo_original>
// kernel: tpu_custom_call.1
$region0: #{tpu_custom_call.1}
  #allocation0 [shape = 'u32[]', space=smem, size = 0x4, offset = 0x4, fixed_abs, tag = 'smem constant byte address 0x4 - core index']
  #allocation1 [shape = 'u32[144,128]{1,0:T(1,128)}', space=vmem, size = 0x12000, scoped, tag = 'internal scratch']
  %s0 = inlined_call_operand.hbm [shape: f32[79], index: 0, kind: input, shape index: {}]
  %s1 = inlined_call_operand.hbm [shape: f32[8,128], index: 1, kind: input, shape index: {}]
  %s2 = inlined_call_operand.hbm [shape: f32[1,128], index: 2, kind: output, shape index: {}]
  %s3 = sld [smem:[#allocation0]]
  $region26: #{tpu_custom_call.1} parent=0
    _
  %s5 = ssub.s32 1, %s3
  %s6 = scalar_select 0, %s5, %s3
  $region1: #{tpu_custom_call.1} parent=0
    #allocation2 [shape = 'u8[512]{0}', space=smem, size = 0x200, scoped, tag = 'input window, operand 0, single buffered']
    #allocation3 [shape = 's32[1]{0}', space=sflag, size = 0x4, scoped, tag = 'scoped memory for tpu_custom_call.1']
    #allocation4 [shape = 's32[1]{0}', space=sflag, size = 0x4, scoped, tag = 'scoped memory for tpu_custom_call.1']
    #allocation5 [shape = 's32[1]{0}', space=sflag, size = 0x4, scoped, tag = 'scoped memory for tpu_custom_call.1']
    #allocation6 [shape = 'u8[4096]{0}', space=vmem, size = 0x1000, scoped, tag = 'input window, operand 1, single buffered']
    #allocation7 [shape = 'u8[512]{0}', space=vmem, size = 0x400, scoped, tag = 'output window, operand 0, single buffered']
    %7 = vsyncpa [#allocation5], 0
    %8 = vsyncpa [#allocation3], 0
    %9 = vsyncpa [#allocation4], 0
    // Predicated region
    $region2: #{tpu_custom_call.1} parent=1 // pred_check
      _
    $region3: #{tpu_custom_call.1} parent=1 // pred_check_branch
      %11 = sbr.rel (0) target = $region5
    $region4: #{tpu_custom_call.1} parent=1 // pred_region
      %s13 = ssub.s32 16, 16
      %14 = vsyncadd [#allocation5], %s13
      %17 = dma.hbm_to_smem %s0, 16, [#allocation2], [#allocation5]
    $region5: #{tpu_custom_call.1} parent=1 // pred_fallthru
      _
    // Predicated region
    $region6: #{tpu_custom_call.1} parent=1 // pred_check
      _
    $region7: #{tpu_custom_call.1} parent=1 // pred_check_branch
      %19 = sbr.rel (0) target = $region9
    $region8: #{tpu_custom_call.1} parent=1 // pred_region
      %s21 = ssub.s32 128, 128
      %22 = vsyncadd [#allocation3], %s21
      %s24 = sshll.u32 [#allocation6], 4
      %s25 = int_to_ptr.vmem [resolvable:$true] %s24
      %27 = dma.hbm_to_vmem [thread:$0]  %s1, 128, %s25, [#allocation3]
    $region9: #{tpu_custom_call.1} parent=1 // pred_fallthru
      _
    // Predicated region
    $region10: #{tpu_custom_call.1} parent=1 // pred_check
      _
    $region11: #{tpu_custom_call.1} parent=1 // pred_check_branch
      %29 = sbr.rel (0) target = $region13
    $region12: #{tpu_custom_call.1} parent=1 // pred_region
      %30 = dma.done [#allocation5], 16
    $region13: #{tpu_custom_call.1} parent=1 // pred_fallthru
      _
    // Predicated region
    $region14: #{tpu_custom_call.1} parent=1 // pred_check
      _
    $region15: #{tpu_custom_call.1} parent=1 // pred_check_branch
      %32 = sbr.rel (0) target = $region17
    $region16: #{tpu_custom_call.1} parent=1 // pred_region
      %33 = dma.done [#allocation3], 128
    $region17: #{tpu_custom_call.1} parent=1 // pred_fallthru
      _
    %34 = sfence
    %v35 = vld [vmem:[#allocation6] sm:$0xff]
    %s36 = sld [smem:[#allocation2]]
    %v37 = vstv %s36
    %v38 = vmul.f32 %v37, %v35
    %s39 = sld [smem:[#allocation2 + $0x1]]
    %v40 = vstv %s39
    %v41 = vmul.f32 %v40, %v35
    %v43 = vrot.slane %v41, 1
    %v45 = vadd.f32 %v38, %v43
    %s46 = sld [smem:[#allocation2 + $0x2]]
    %v47 = vstv %s46
    %v48 = vmul.f32 %v47, %v35
    %v50 = vrot.slane %v48, 2
    %v52 = vadd.f32 %v45, %v50
    %s53 = sld [smem:[#allocation2 + $0x3]]
    %v54 = vstv %s53
    %v55 = vmul.f32 %v54, %v35
    %v57 = vrot.slane %v55, 3
    %v59 = vadd.f32 %v52, %v57
    %s60 = sld [smem:[#allocation2 + $0x4]]
    %v61 = vstv %s60
    %v62 = vmul.f32 %v61, %v35
    %v64 = vrot.slane %v62, 4
    %v66 = vadd.f32 %v59, %v64
    %s67 = sld [smem:[#allocation2 + $0x5]]
    %v68 = vstv %s67
    %v69 = vmul.f32 %v68, %v35
    %v71 = vrot.slane %v69, 5
    %v73 = vadd.f32 %v66, %v71
    %s74 = sld [smem:[#allocation2 + $0x6]]
    %v75 = vstv %s74
    %v76 = vmul.f32 %v75, %v35
    %v78 = vrot.slane %v76, 6
    %v80 = vadd.f32 %v73, %v78
    %s81 = sld [smem:[#allocation2 + $0x7]]
    %v82 = vstv %s81
    %v83 = vmul.f32 %v82, %v35
    %v85 = vrot.slane %v83, 7
    %v87 = vadd.f32 %v80, %v85
    %s88 = sld [smem:[#allocation2 + $0x30]]
    %v89 = vstv %s88
    %v90 = vadd.f32 %v87, %v89
    %v91 = vmax.f32 %v90, 0.0
    %s92 = sld [smem:[#allocation2 + $0x8]]
    %v93 = vstv %s92
    %v94 = vmul.f32 %v93, %v35
    %s95 = sld [smem:[#allocation2 + $0x9]]
    %v96 = vstv %s95
    %v97 = vmul.f32 %v96, %v35
    %v99 = vrot.slane %v97, 1
    %v101 = vadd.f32 %v94, %v99
    %s102 = sld [smem:[#allocation2 + $0xa]]
    %v103 = vstv %s102
    %v104 = vmul.f32 %v103, %v35
    %v106 = vrot.slane %v104, 2
    %v108 = vadd.f32 %v101, %v106
    %s109 = sld [smem:[#allocation2 + $0xb]]
    %v110 = vstv %s109
    %v111 = vmul.f32 %v110, %v35
    %v113 = vrot.slane %v111, 3
    %v115 = vadd.f32 %v108, %v113
    %s116 = sld [smem:[#allocation2 + $0xc]]
    %v117 = vstv %s116
    %v118 = vmul.f32 %v117, %v35
    %v120 = vrot.slane %v118, 4
    %v122 = vadd.f32 %v115, %v120
    %s123 = sld [smem:[#allocation2 + $0xd]]
    %v124 = vstv %s123
    %v125 = vmul.f32 %v124, %v35
    %v127 = vrot.slane %v125, 5
    %v129 = vadd.f32 %v122, %v127
    %s130 = sld [smem:[#allocation2 + $0xe]]
    %v131 = vstv %s130
    %v132 = vmul.f32 %v131, %v35
    %v134 = vrot.slane %v132, 6
    %v136 = vadd.f32 %v129, %v134
    %s137 = sld [smem:[#allocation2 + $0xf]]
    %v138 = vstv %s137
    %v139 = vmul.f32 %v138, %v35
    %v141 = vrot.slane %v139, 7
    %v143 = vadd.f32 %v136, %v141
    %s144 = sld [smem:[#allocation2 + $0x31]]
    %v145 = vstv %s144
    %v146 = vadd.f32 %v143, %v145
    %v147 = vmax.f32 %v146, 0.0
    %s148 = sld [smem:[#allocation2 + $0x10]]
    %v149 = vstv %s148
    %v150 = vmul.f32 %v149, %v35
    %s151 = sld [smem:[#allocation2 + $0x11]]
    %v152 = vstv %s151
    %v153 = vmul.f32 %v152, %v35
    %v155 = vrot.slane %v153, 1
    %v157 = vadd.f32 %v150, %v155
    %s158 = sld [smem:[#allocation2 + $0x12]]
    %v159 = vstv %s158
    %v160 = vmul.f32 %v159, %v35
    %v162 = vrot.slane %v160, 2
    %v164 = vadd.f32 %v157, %v162
    %s165 = sld [smem:[#allocation2 + $0x13]]
    %v166 = vstv %s165
    %v167 = vmul.f32 %v166, %v35
    %v169 = vrot.slane %v167, 3
    %v171 = vadd.f32 %v164, %v169
    %s172 = sld [smem:[#allocation2 + $0x14]]
    %v173 = vstv %s172
    %v174 = vmul.f32 %v173, %v35
    %v176 = vrot.slane %v174, 4
    %v178 = vadd.f32 %v171, %v176
    %s179 = sld [smem:[#allocation2 + $0x15]]
    %v180 = vstv %s179
    %v181 = vmul.f32 %v180, %v35
    %v183 = vrot.slane %v181, 5
    %v185 = vadd.f32 %v178, %v183
    %s186 = sld [smem:[#allocation2 + $0x16]]
    %v187 = vstv %s186
    %v188 = vmul.f32 %v187, %v35
    %v190 = vrot.slane %v188, 6
    %v192 = vadd.f32 %v185, %v190
    %s193 = sld [smem:[#allocation2 + $0x17]]
    %v194 = vstv %s193
    %v195 = vmul.f32 %v194, %v35
    %v197 = vrot.slane %v195, 7
    %v199 = vadd.f32 %v192, %v197
    %s200 = sld [smem:[#allocation2 + $0x32]]
    %v201 = vstv %s200
    %v202 = vadd.f32 %v199, %v201
    %v203 = vmax.f32 %v202, 0.0
    %s204 = sld [smem:[#allocation2 + $0x18]]
    %v205 = vstv %s204
    %v206 = vmul.f32 %v205, %v35
    %s207 = sld [smem:[#allocation2 + $0x19]]
    %v208 = vstv %s207
    %v209 = vmul.f32 %v208, %v35
    %v211 = vrot.slane %v209, 1
    %v213 = vadd.f32 %v206, %v211
    %s214 = sld [smem:[#allocation2 + $0x1a]]
    %v215 = vstv %s214
    %v216 = vmul.f32 %v215, %v35
    %v218 = vrot.slane %v216, 2
    %v220 = vadd.f32 %v213, %v218
    %s221 = sld [smem:[#allocation2 + $0x1b]]
    %v222 = vstv %s221
    %v223 = vmul.f32 %v222, %v35
    %v225 = vrot.slane %v223, 3
    %v227 = vadd.f32 %v220, %v225
    %s228 = sld [smem:[#allocation2 + $0x1c]]
    %v229 = vstv %s228
    %v230 = vmul.f32 %v229, %v35
    %v232 = vrot.slane %v230, 4
    %v234 = vadd.f32 %v227, %v232
    %s235 = sld [smem:[#allocation2 + $0x1d]]
    %v236 = vstv %s235
    %v237 = vmul.f32 %v236, %v35
    %v239 = vrot.slane %v237, 5
    %v241 = vadd.f32 %v234, %v239
    %s242 = sld [smem:[#allocation2 + $0x1e]]
    %v243 = vstv %s242
    %v244 = vmul.f32 %v243, %v35
    %v246 = vrot.slane %v244, 6
    %v248 = vadd.f32 %v241, %v246
    %s249 = sld [smem:[#allocation2 + $0x1f]]
    %v250 = vstv %s249
    %v251 = vmul.f32 %v250, %v35
    %v253 = vrot.slane %v251, 7
    %v255 = vadd.f32 %v248, %v253
    %s256 = sld [smem:[#allocation2 + $0x33]]
    %v257 = vstv %s256
    %v258 = vadd.f32 %v255, %v257
    %v259 = vmax.f32 %v258, 0.0
    %s260 = sld [smem:[#allocation2 + $0x20]]
    %v261 = vstv %s260
    %v262 = vmul.f32 %v261, %v35
    %s263 = sld [smem:[#allocation2 + $0x21]]
    %v264 = vstv %s263
    %v265 = vmul.f32 %v264, %v35
    %v267 = vrot.slane %v265, 1
    %v269 = vadd.f32 %v262, %v267
    %s270 = sld [smem:[#allocation2 + $0x22]]
    %v271 = vstv %s270
    %v272 = vmul.f32 %v271, %v35
    %v274 = vrot.slane %v272, 2
    %v276 = vadd.f32 %v269, %v274
    %s277 = sld [smem:[#allocation2 + $0x23]]
    %v278 = vstv %s277
    %v279 = vmul.f32 %v278, %v35
    %v281 = vrot.slane %v279, 3
    %v283 = vadd.f32 %v276, %v281
    %s284 = sld [smem:[#allocation2 + $0x24]]
    %v285 = vstv %s284
    %v286 = vmul.f32 %v285, %v35
    %v288 = vrot.slane %v286, 4
    %v290 = vadd.f32 %v283, %v288
    %s291 = sld [smem:[#allocation2 + $0x25]]
    %v292 = vstv %s291
    %v293 = vmul.f32 %v292, %v35
    %v295 = vrot.slane %v293, 5
    %v297 = vadd.f32 %v290, %v295
    %s298 = sld [smem:[#allocation2 + $0x26]]
    %v299 = vstv %s298
    %v300 = vmul.f32 %v299, %v35
    %v302 = vrot.slane %v300, 6
    %v304 = vadd.f32 %v297, %v302
    %s305 = sld [smem:[#allocation2 + $0x27]]
    %v306 = vstv %s305
    %v307 = vmul.f32 %v306, %v35
    %v309 = vrot.slane %v307, 7
    %v311 = vadd.f32 %v304, %v309
    %s312 = sld [smem:[#allocation2 + $0x34]]
    %v313 = vstv %s312
    %v314 = vadd.f32 %v311, %v313
    %v315 = vmax.f32 %v314, 0.0
    %s316 = sld [smem:[#allocation2 + $0x28]]
    %v317 = vstv %s316
    %v318 = vmul.f32 %v317, %v35
    %s319 = sld [smem:[#allocation2 + $0x29]]
    %v320 = vstv %s319
    %v321 = vmul.f32 %v320, %v35
    %v323 = vrot.slane %v321, 1
    %v325 = vadd.f32 %v318, %v323
    %s326 = sld [smem:[#allocation2 + $0x2a]]
    %v327 = vstv %s326
    %v328 = vmul.f32 %v327, %v35
    %v330 = vrot.slane %v328, 2
    %v332 = vadd.f32 %v325, %v330
    %s333 = sld [smem:[#allocation2 + $0x2b]]
    %v334 = vstv %s333
    %v335 = vmul.f32 %v334, %v35
    %v337 = vrot.slane %v335, 3
    %v339 = vadd.f32 %v332, %v337
    %s340 = sld [smem:[#allocation2 + $0x2c]]
    %v341 = vstv %s340
    %v342 = vmul.f32 %v341, %v35
    %v344 = vrot.slane %v342, 4
    %v346 = vadd.f32 %v339, %v344
    %s347 = sld [smem:[#allocation2 + $0x2d]]
    %v348 = vstv %s347
    %v349 = vmul.f32 %v348, %v35
    %v351 = vrot.slane %v349, 5
    %v353 = vadd.f32 %v346, %v351
    %s354 = sld [smem:[#allocation2 + $0x2e]]
    %v355 = vstv %s354
    %v356 = vmul.f32 %v355, %v35
    %v358 = vrot.slane %v356, 6
    %v360 = vadd.f32 %v353, %v358
    %s361 = sld [smem:[#allocation2 + $0x2f]]
    %v362 = vstv %s361
    %v363 = vmul.f32 %v362, %v35
    %v365 = vrot.slane %v363, 7
    %v367 = vadd.f32 %v360, %v365
    %s368 = sld [smem:[#allocation2 + $0x35]]
    %v369 = vstv %s368
    %v370 = vadd.f32 %v367, %v369
    %v371 = vmax.f32 %v370, 0.0
    %s372 = sld [smem:[#allocation2 + $0x36]]
    %v373 = vstv %s372
    %v374 = vmul.f32 %v373, %v91
    %s375 = sld [smem:[#allocation2 + $0x37]]
    %v376 = vstv %s375
    %v377 = vmul.f32 %v376, %v147
    %v378 = vadd.f32 %v374, %v377
    %s379 = sld [smem:[#allocation2 + $0x38]]
    %v380 = vstv %s379
    %v381 = vmul.f32 %v380, %v203
    %v382 = vadd.f32 %v378, %v381
    %s383 = sld [smem:[#allocation2 + $0x39]]
    %v384 = vstv %s383
    %v385 = vmul.f32 %v384, %v259
    %v386 = vadd.f32 %v382, %v385
    %s387 = sld [smem:[#allocation2 + $0x3a]]
    %v388 = vstv %s387
    %v389 = vmul.f32 %v388, %v315
    %v390 = vadd.f32 %v386, %v389
    %s391 = sld [smem:[#allocation2 + $0x3b]]
    %v392 = vstv %s391
    %v393 = vmul.f32 %v392, %v371
    %v394 = vadd.f32 %v390, %v393
    %s395 = sld [smem:[#allocation2 + $0x48]]
    %v396 = vstv %s395
    %v397 = vadd.f32 %v394, %v396
    %v398 = vmax.f32 %v397, 0.0
    %s399 = sld [smem:[#allocation2 + $0x3c]]
    %v400 = vstv %s399
    %v401 = vmul.f32 %v400, %v91
    %s402 = sld [smem:[#allocation2 + $0x3d]]
    %v403 = vstv %s402
    %v404 = vmul.f32 %v403, %v147
    %v405 = vadd.f32 %v401, %v404
    %s406 = sld [smem:[#allocation2 + $0x3e]]
    %v407 = vstv %s406
    %v408 = vmul.f32 %v407, %v203
    %v409 = vadd.f32 %v405, %v408
    %s410 = sld [smem:[#allocation2 + $0x3f]]
    %v411 = vstv %s410
    %v412 = vmul.f32 %v411, %v259
    %v413 = vadd.f32 %v409, %v412
    %s414 = sld [smem:[#allocation2 + $0x40]]
    %v415 = vstv %s414
    %v416 = vmul.f32 %v415, %v315
    %v417 = vadd.f32 %v413, %v416
    %s418 = sld [smem:[#allocation2 + $0x41]]
    %v419 = vstv %s418
    %v420 = vmul.f32 %v419, %v371
    %v421 = vadd.f32 %v417, %v420
    %s422 = sld [smem:[#allocation2 + $0x49]]
    %v423 = vstv %s422
    %v424 = vadd.f32 %v421, %v423
    %v425 = vmax.f32 %v424, 0.0
    %s426 = sld [smem:[#allocation2 + $0x42]]
    %v427 = vstv %s426
    %v428 = vmul.f32 %v427, %v91
    %s429 = sld [smem:[#allocation2 + $0x43]]
    %v430 = vstv %s429
    %v431 = vmul.f32 %v430, %v147
    %v432 = vadd.f32 %v428, %v431
    %s433 = sld [smem:[#allocation2 + $0x44]]
    %v434 = vstv %s433
    %v435 = vmul.f32 %v434, %v203
    %v436 = vadd.f32 %v432, %v435
    %s437 = sld [smem:[#allocation2 + $0x45]]
    %v438 = vstv %s437
    %v439 = vmul.f32 %v438, %v259
    %v440 = vadd.f32 %v436, %v439
    %s441 = sld [smem:[#allocation2 + $0x46]]
    %v442 = vstv %s441
    %v443 = vmul.f32 %v442, %v315
    %v444 = vadd.f32 %v440, %v443
    %s445 = sld [smem:[#allocation2 + $0x47]]
    %v446 = vstv %s445
    %v447 = vmul.f32 %v446, %v371
    %v448 = vadd.f32 %v444, %v447
    %s449 = sld [smem:[#allocation2 + $0x4a]]
    %v450 = vstv %s449
    %v451 = vadd.f32 %v448, %v450
    %v452 = vmax.f32 %v451, 0.0
    %s453 = sld [smem:[#allocation2 + $0x4b]]
    %v454 = vstv %s453
    %v455 = vmul.f32 %v454, %v398
    %s456 = sld [smem:[#allocation2 + $0x4c]]
    %v457 = vstv %s456
    %v458 = vmul.f32 %v457, %v425
    %v459 = vadd.f32 %v455, %v458
    %s460 = sld [smem:[#allocation2 + $0x4d]]
    %v461 = vstv %s460
    %v462 = vmul.f32 %v461, %v452
    %v463 = vadd.f32 %v459, %v462
    %s464 = sld [smem:[#allocation2 + $0x4e]]
    %v465 = vstv %s464
    %v466 = vadd.f32 %v463, %v465
    %v467 = vmax.f32 %v466, 0.0
    %468 = vst [vmem:[#allocation7] sm:$0x1] %v467
    // Predicated region
    $region18: #{tpu_custom_call.1} parent=1 // pred_check
      _
    $region19: #{tpu_custom_call.1} parent=1 // pred_check_branch
      %470 = sbr.rel (0) target = $region21
    $region20: #{tpu_custom_call.1} parent=1 // pred_region
      %s472 = ssub.s32 16, 16
      %473 = vsyncadd [#allocation4], %s472
      %s475 = sshll.u32 [#allocation7], 4
      %s476 = int_to_ptr.vmem [resolvable:$true] %s475
      %478 = dma.vmem_to_hbm [thread:$0]  %s476, 16, %s2, [#allocation4]
    $region21: #{tpu_custom_call.1} parent=1 // pred_fallthru
      _
    // Predicated region
    $region22: #{tpu_custom_call.1} parent=1 // pred_check
      _
    $region23: #{tpu_custom_call.1} parent=1 // pred_check_branch
      %480 = sbr.rel (0) target = $region25
    $region24: #{tpu_custom_call.1} parent=1 // pred_region
      %481 = dma.done [#allocation4], 16
    $region25: #{tpu_custom_call.1} parent=1 // pred_fallthru
      _
    %482 = vsyncpa [#allocation3], 1
    %483 = vsyncpa [#allocation4], 1
    %484 = vsyncpa [#allocation5], 1

</llo_original>
